<compile_context>
chip_gen: v7x
topology: tpu7x:2x2x1
jax: 0.10.0
libtpu: 0.0.40
codegen_flags: <defaults>
</compile_context>

<pallas_src>
import functools
import math

import jax
import jax.numpy as jnp
from jax.experimental import pallas as pl
from jax.experimental.pallas import tpu as pltpu

# -log(1e-4): the only nonzero value of -log(clip(one_hot, 1e-4, 1.0)).
_NEG_LOG_1E4 = -math.log(1e-4)


def _sce_partial_kernel(pred_ref, labels_ref, out_ref, *,
                        n_total, tile_n, needs_mask):
    """Per-tile partial sums of CE and RCE for SCELoss."""
    i = pl.program_id(0)

    pred = pred_ref[...].astype(jnp.float32)             # (tile_n, C)
    labels = labels_ref[...]                              # (tile_n, 1) int32
    tn, c = pred.shape

    # one-hot as a boolean compare (no float one-hot materialized).
    is_label = jax.lax.broadcasted_iota(jnp.int32, (tn, c), 1) == labels

    # --- shared softmax pieces ---
    m = jnp.max(pred, axis=1, keepdims=True)
    shifted = pred - m
    exp_s = jnp.exp(shifted)
    sum_exp = jnp.sum(exp_s, axis=1, keepdims=True)       # (tile_n, 1)

    # --- standard cross entropy (per row), log_softmax folded away ---
    #   -log_softmax[label] = log(sum_exp) - shifted[label]
    shifted_label = jnp.sum(jnp.where(is_label, shifted, 0.0),
                            axis=1, keepdims=True)
    ce_per = jnp.log(sum_exp) - shifted_label             # (tile_n, 1)

    # --- reverse cross entropy (per row), log(clip(one_hot)) folded away ---
    # Per-row exact reciprocal (N divides) + broadcast multiply instead of a
    # full-tile (N x C) divide.  Exact to hold the 1e-5 reference tolerance.
    inv = 1.0 / sum_exp                                   # (tile_n, 1)
    p = jnp.clip(exp_s * inv, 1e-7, 1.0)                  # clamped softmax
    rce_per = _NEG_LOG_1E4 * jnp.sum(jnp.where(is_label, 0.0, p),
                                     axis=1, keepdims=True)

    if needs_mask:
        # Rows past the true batch size carry undefined tile data; their
        # per-row results may be NaN/Inf.  Kill them with a select (NOT a
        # multiply, so NaN/Inf cannot leak into the tile sum).
        row_ids = i * tile_n + jax.lax.broadcasted_iota(jnp.int32, (tn, 1), 0)
        valid = row_ids < n_total                          # (tile_n, 1) bool
        ce_per = jnp.where(valid, ce_per, 0.0)
        rce_per = jnp.where(valid, rce_per, 0.0)

    # Single vector store of both partial sums.
    both = jnp.concatenate([ce_per, rce_per], axis=1)      # (tile_n, 2)
    out_ref[...] = jnp.sum(both, axis=0).reshape(1, 1, 2)


def _choose_tile_n(n, c, in_itemsize):
    """Tile rows sized from a VMEM working-set budget, not an arbitrary cap.

    Working set per tile ~= 2 x double-buffered input tile (input dtype) plus
    ~6 live (tile_n, C) f32 temporaries in the body (f32 cast, shifted, exp_s,
    clipped p, is_label / where intermediates).  Temporaries are always 4 B
    regardless of the input dtype (bf16 inputs are cast to f32 in-kernel).
    """
    budget_bytes = 32 * 1024 * 1024          # leaves headroom under 48 MiB scope
    per_row_bytes = c * (2 * in_itemsize + 6 * 4)
    rows = budget_bytes // max(1, per_row_bytes)
    rows = max(8, min(32768, int(rows)))
    rows = (rows // 8) * 8                   # sublane multiple
    if rows >= n:
        return n          # single full-array block (no alignment constraint)
    return rows


def sce_loss(pred, labels, *, alpha, beta, num_classes, tile_n=None):
    """pred: (N, num_classes) float logits; labels: (N,) int class ids."""
    n, c = pred.shape
    assert c == num_classes
    labels2d = labels.reshape(n, 1).astype(jnp.int32)

    if tile_n is None:
        tile_n = _choose_tile_n(n, c, jnp.dtype(pred.dtype).itemsize)
    grid_n = pl.cdiv(n, tile_n)
    needs_mask = (n % tile_n) != 0

    kernel = functools.partial(_sce_partial_kernel,
                               n_total=n, tile_n=tile_n, needs_mask=needs_mask)

    partial = pl.pallas_call(
        kernel,
        out_shape=jax.ShapeDtypeStruct((grid_n, 1, 2), jnp.float32),
        grid=(grid_n,),
        in_specs=[
            pl.BlockSpec((tile_n, c), lambda i: (i, 0)),
            pl.BlockSpec((tile_n, 1), lambda i: (i, 0)),
        ],
        out_specs=pl.BlockSpec((1, 1, 2), lambda i: (i, 0, 0)),
        compiler_params=pltpu.CompilerParams(
            dimension_semantics=("parallel",),
            vmem_limit_bytes=48 * 1024 * 1024),
    )(pred, labels2d)

    ce = jnp.sum(partial[:, 0, 0]) / n
    rce = jnp.sum(partial[:, 0, 1]) / n
    return alpha * ce + beta * rce


def _reference(pred, labels, alpha, beta, num_classes):
    # Pure-JAX mirror of the PyTorch SCELoss forward.
    predf = pred.astype(jnp.float32)
    logp = jax.nn.log_softmax(predf, axis=1)
    one_hot = jax.nn.one_hot(labels, num_classes, dtype=jnp.float32)
    ce = jnp.mean(-jnp.sum(one_hot * logp, axis=1))
    p = jnp.clip(jax.nn.softmax(predf, axis=1), 1e-7, 1.0)
    ohc = jnp.clip(one_hot, 1e-4, 1.0)
    rce = -jnp.sum(p * jnp.log(ohc), axis=1)
    return alpha * ce + beta * jnp.mean(rce)


if __name__ == "__main__":
    key = jax.random.PRNGKey(0)
    k1, k2, k3, k4 = jax.random.split(key, 4)

    num_classes = 10
    alpha, beta = 1.0, 1.0

    # Case 1: small batch -> single full-array block.
    pred = jax.random.normal(k1, (8, num_classes), dtype=jnp.float32)
    labels = jax.random.randint(k2, (8,), 0, num_classes, dtype=jnp.int32)
    loss = sce_loss(pred, labels, alpha=alpha, beta=beta,
                    num_classes=num_classes)
    jax.block_until_ready(loss)
    ref = _reference(pred, labels, alpha, beta, num_classes)
    assert jnp.allclose(loss, ref, rtol=1e-5, atol=1e-5), (loss, ref)

    # Case 2: force the tiled path with a ragged last tile (20 rows, tile 8).
    pred2 = jax.random.normal(k3, (20, num_classes), dtype=jnp.float32)
    labels2 = jax.random.randint(k4, (20,), 0, num_classes, dtype=jnp.int32)
    loss2 = sce_loss(pred2, labels2, alpha=alpha, beta=beta,
                     num_classes=num_classes, tile_n=8)
    jax.block_until_ready(loss2)
    ref2 = _reference(pred2, labels2, alpha, beta, num_classes)
    assert jnp.allclose(loss2, ref2, rtol=1e-5, atol=1e-5), (loss2, ref2)

    print("KERNEL_OK")
</pallas_src>

<mosaic_0001>
module attributes {stable_mosaic.version = 11 : i64} {
  func.func @_sce_partial_kernel(%arg0: i32, %arg1: memref<8x10xf32, #tpu.memory_space<vmem>>, %arg2: memref<8x1xi32, #tpu.memory_space<vmem>>, %arg3: memref<1x1x2xf32, #tpu.memory_space<vmem>>) attributes {dimension_semantics = [#tpu.dimension_semantics<parallel>], iteration_bounds = array<i64: 1>, scalar_prefetch = 0 : i64, scratch_operands = 0 : i64, tpu.core_type = #tpu.core_type<tc>, window_params = [{transform_indices = @transform_0, window_bounds = array<i64: 8, 10>}, {transform_indices = @transform_1, window_bounds = array<i64: 8, 1>}, {transform_indices = @transform_2, window_bounds = array<i64: 1, 1, 2>}]} {
    %c0 = arith.constant 0 : index
    %c0_0 = arith.constant 0 : index
    %0 = vector.load %arg1[%c0, %c0_0] : memref<8x10xf32, #tpu.memory_space<vmem>>, vector<8x10xf32>
    %c0_1 = arith.constant 0 : index
    %c0_2 = arith.constant 0 : index
    %1 = vector.load %arg2[%c0_1, %c0_2] : memref<8x1xi32, #tpu.memory_space<vmem>>, vector<8x1xi32>
    %2 = tpu.iota {dimensions = array<i32: 1>} : vector<8x10xi32>
    %3 = vector.broadcast %1 : vector<8x1xi32> to vector<8x10xi32>
    %4 = arith.cmpi eq, %2, %3 : vector<8x10xi32>
    %cst = arith.constant dense<0xFF800000> : vector<8xf32>
    %5 = vector.multi_reduction <maximumf>, %0, %cst [1] : vector<8x10xf32> to vector<8xf32>
    %6 = vector.shape_cast %5 : vector<8xf32> to vector<8x1xf32>
    %7 = vector.broadcast %6 : vector<8x1xf32> to vector<8x10xf32>
    %8 = arith.subf %0, %7 : vector<8x10xf32>
    %9 = math.exp %8 : vector<8x10xf32>
    %cst_3 = arith.constant dense<0.000000e+00> : vector<8xf32>
    %10 = vector.multi_reduction <add>, %9, %cst_3 [1] : vector<8x10xf32> to vector<8xf32>
    %11 = vector.shape_cast %10 : vector<8xf32> to vector<8x1xf32>
    %cst_4 = arith.constant 0.000000e+00 : f32
    %12 = vector.broadcast %cst_4 : f32 to vector<8x10xf32>
    %13 = arith.select %4, %8, %12 : vector<8x10xi1>, vector<8x10xf32>
    %cst_5 = arith.constant dense<0.000000e+00> : vector<8xf32>
    %14 = vector.multi_reduction <add>, %13, %cst_5 [1] : vector<8x10xf32> to vector<8xf32>
    %15 = vector.shape_cast %14 : vector<8xf32> to vector<8x1xf32>
    %16 = math.log %11 : vector<8x1xf32>
    %17 = arith.subf %16, %15 : vector<8x1xf32>
    %cst_6 = arith.constant 1.000000e+00 : f32
    %18 = vector.broadcast %cst_6 : f32 to vector<8x1xf32>
    %19 = arith.divf %18, %11 : vector<8x1xf32>
    %20 = vector.broadcast %19 : vector<8x1xf32> to vector<8x10xf32>
    %21 = arith.mulf %9, %20 : vector<8x10xf32>
    %cst_7 = arith.constant 1.000000e-07 : f32
    %cst_8 = arith.constant 1.000000e+00 : f32
    %22 = vector.broadcast %cst_7 : f32 to vector<8x10xf32>
    %23 = arith.maximumf %22, %21 : vector<8x10xf32>
    %24 = vector.broadcast %cst_8 : f32 to vector<8x10xf32>
    %25 = arith.minimumf %24, %23 : vector<8x10xf32>
    %cst_9 = arith.constant 0.000000e+00 : f32
    %26 = vector.broadcast %cst_9 : f32 to vector<8x10xf32>
    %27 = arith.select %4, %26, %25 : vector<8x10xi1>, vector<8x10xf32>
    %cst_10 = arith.constant dense<0.000000e+00> : vector<8xf32>
    %28 = vector.multi_reduction <add>, %27, %cst_10 [1] : vector<8x10xf32> to vector<8xf32>
    %29 = vector.shape_cast %28 : vector<8xf32> to vector<8x1xf32>
    %cst_11 = arith.constant 9.21034049 : f32
    %30 = vector.broadcast %cst_11 : f32 to vector<8x1xf32>
    %31 = arith.mulf %30, %29 : vector<8x1xf32>
    %32 = tpu.concatenate %17, %31 in 1 : vector<8x1xf32>, vector<8x1xf32> -> vector<8x2xf32>
    %cst_12 = arith.constant dense<0.000000e+00> : vector<2xf32>
    %33 = vector.multi_reduction <add>, %32, %cst_12 [0] : vector<8x2xf32> to vector<2xf32>
    %34 = vector.shape_cast %33 : vector<2xf32> to vector<1x1x2xf32>
    %c0_13 = arith.constant 0 : index
    %c0_14 = arith.constant 0 : index
    %c0_15 = arith.constant 0 : index
    %35 = vector.load %arg3[%c0_13, %c0_14, %c0_15] : memref<1x1x2xf32, #tpu.memory_space<vmem>>, vector<1x1x2xf32>
    tpu.vector_store %arg3[%c0_13, %c0_14, %c0_15], %34 {strides = array<i32>} : memref<1x1x2xf32, #tpu.memory_space<vmem>>, vector<1x1x2xf32>,
    return
  }
  func.func @transform_0(%arg0: i32) -> (i32, i32) {
    %c0_i32 = arith.constant 0 : i32
    %c0_i32_0 = arith.constant 0 : i32
    return %arg0, %c0_i32 : i32, i32
  }
  func.func @transform_1(%arg0: i32) -> (i32, i32) {
    %c0_i32 = arith.constant 0 : i32
    %c0_i32_0 = arith.constant 0 : i32
    return %arg0, %c0_i32 : i32, i32
  }
  func.func @transform_2(%arg0: i32) -> (i32, i32, i32) {
    %c0_i32 = arith.constant 0 : i32
    %c0_i32_0 = arith.constant 0 : i32
    %c0_i32_1 = arith.constant 0 : i32
    return %arg0, %c0_i32, %c0_i32_0 : i32, i32, i32
  }
}

</mosaic_0001>

<llo_original>
// kernel: tpu_custom_call.1
$region0: #{tpu_custom_call.1}
  #allocation0 [shape = 'u32[]', space=smem, size = 0x4, offset = 0x4, fixed_abs, tag = 'smem constant byte address 0x4 - core index']
  #allocation1 [shape = 'u32[144,128]{1,0:T(1,128)}', space=vmem, size = 0x12000, scoped, tag = 'internal scratch']
  %s0 = inlined_call_operand.vmem [shape: f32[8,10], index: 0, kind: input, shape index: {}]
  %s1 = inlined_call_operand.vmem [shape: s32[8,1], index: 1, kind: input, shape index: {}]
  %s2 = inlined_call_operand.hbm [shape: f32[1,1,2], index: 2, kind: output, shape index: {}]
  %s3 = sld [smem:[#allocation0]]
  $region18: #{tpu_custom_call.1} parent=0
    _
  %s5 = ssub.s32 1, %s3
  %s6 = scalar_select 0, %s5, %s3
  $region1: #{tpu_custom_call.1} parent=0
    #allocation2 [shape = 'u8[512]{0}', space=vmem, size = 0x400, scoped, tag = 'output window, operand 0, single buffered']
    #allocation3 [shape = 's32[1]{0}', space=sflag, size = 0x4, scoped, tag = 'scoped memory for tpu_custom_call.1']
    %7 = vsyncpa [#allocation3], 0
    // Predicated region
    $region2: #{tpu_custom_call.1} parent=1 // pred_check
      _
    $region3: #{tpu_custom_call.1} parent=1 // pred_check_branch
      %9 = sbr.rel (0) target = $region5
    $region4: #{tpu_custom_call.1} parent=1 // pred_region
      _
    $region5: #{tpu_custom_call.1} parent=1 // pred_fallthru
      _
    // Predicated region
    $region6: #{tpu_custom_call.1} parent=1 // pred_check
      _
    $region7: #{tpu_custom_call.1} parent=1 // pred_check_branch
      %11 = sbr.rel (0) target = $region9
    $region8: #{tpu_custom_call.1} parent=1 // pred_region
      _
    $region9: #{tpu_custom_call.1} parent=1 // pred_fallthru
      _
    %v12 = vld [vmem:[%s0] sm:$0xff]
    %v13 = vld [vmem:[%s1] sm:$0xff]
    %v14 = vlaneseq
    %v15 = vand.u32 %v14, 127
    %16 = vset.pattern.permute.xlu0 0
    %17 = vperm.xlu0 %16, %v13
    %v18 = vpop.permute.xlu0 %17
    %vm19 = vcmp.eq.s32.totalorder %v15, %v18
    %vm20 = vcmask 80896
    %v21 = vsel %vm20, %v12, -inf
    %22 = vmax.xlane.f32.xlu0 %v21
    %v23 = vpop.xlane.xlu0 %22
    %v24 = vsub.f32 %v12, %v23
    %v25 = vmul.f32 %v24, 1.442695
    %v26 = vpow.pop %v25
    %v27 = vsel %vm20, %v26, 0.0
    %28 = vadd.xlane.f32.xlu0 %v27
    %v29 = vpop.xlane.xlu0 %28
    %v30 = vsel %vm19, %v24, 0.0
    %v31 = vsel %vm20, %v30, 0.0
    %32 = vadd.xlane.f32.xlu0 %v31
    %v33 = vpop.xlane.xlu0 %32
    %v34 = vlog2.pop %v29
    %v35 = vmul.f32 %v34, 0.6931472
    %v36 = vsub.f32 %v35, %v33
    %v37 = vrcp.pop %v29
    %v38 = vmul.f32 1.0, %v37
    %v39 = vmul.f32 %v26, %v38
    %v40 = vmax.f32 %v39, 1e-07
    %v41 = vmin.f32 %v40, 1.0
    %v42 = vsel %vm19, 0.0, %v41
    %v43 = vsel %vm20, %v42, 0.0
    %44 = vadd.xlane.f32.xlu0 %v43
    %v45 = vpop.xlane.xlu0 %44
    %v46 = vmul.f32 %v45, 9.2103405
    %vm47 = vcmask 7168
    %v48 = vsel %vm47, %v36, %v46
    %vm49 = vcmask 15360
    %v50 = vsel %vm49, %v48, 0.0
    %v51 = vrot.slane %v50, 4
    %v52 = vadd.f32 %v50, %v51
    %v53 = vrot.slane %v52, 2
    %v54 = vadd.f32 %v52, %v53
    %v55 = vrot.slane %v54, 1
    %v56 = vadd.f32 %v54, %v55
    %vm57 = vcmask 8192
    %58 = vst.msk [vmem:[#allocation2] sm:$0x1] %vm57, %v56
    // Predicated region
    $region10: #{tpu_custom_call.1} parent=1 // pred_check
      _
    $region11: #{tpu_custom_call.1} parent=1 // pred_check_branch
      %60 = sbr.rel (0) target = $region13
    $region12: #{tpu_custom_call.1} parent=1 // pred_region
      %s62 = ssub.s32 16, 16
      %63 = vsyncadd [#allocation3], %s62
      %s65 = sshll.u32 [#allocation2], 4
      %s66 = int_to_ptr.vmem [resolvable:$true] %s65
      %68 = dma.vmem_to_hbm [thread:$0]  %s66, 16, %s2, [#allocation3]
    $region13: #{tpu_custom_call.1} parent=1 // pred_fallthru
      _
    // Predicated region
    $region14: #{tpu_custom_call.1} parent=1 // pred_check
      _
    $region15: #{tpu_custom_call.1} parent=1 // pred_check_branch
      %70 = sbr.rel (0) target = $region17
    $region16: #{tpu_custom_call.1} parent=1 // pred_region
      %71 = dma.done [#allocation3], 16
    $region17: #{tpu_custom_call.1} parent=1 // pred_fallthru
      _
    %72 = vsyncpa [#allocation3], 1

</llo_original>
